<compile_context>
chip_gen: v7x
topology: tpu7x:2x2x1
jax: 0.10.0
libtpu: 0.0.40
codegen_flags: <defaults>
</compile_context>

<pallas_src>
import jax
import jax.numpy as jnp
from jax.experimental import pallas as pl
from jax.experimental.pallas import tpu as pltpu


# --------------------------------------------------------------------------
# Kernels
# --------------------------------------------------------------------------
def _bmm_kernel_single(a_ref, b_ref, o_ref):
    # Whole reduction in one tile: grid = (batch, m-tile, n-tile).
    # a_ref: (tm, K), b_ref: (K, tn), o_ref: (tm, tn)   (batch dim squeezed)
    o_ref[...] = jnp.dot(
        a_ref[...], b_ref[...], preferred_element_type=jnp.float32
    ).astype(o_ref.dtype)


def _bmm_kernel_ksplit_f32(a_ref, b_ref, o_ref):
    # grid = (batch, m-tile, n-tile, k-tile); k (last) is the reduction axis.
    # Output block index is independent of k -> o_ref stays resident, so for
    # f32 outputs we accumulate directly into it (no scratch needed).
    @pl.when(pl.program_id(3) == 0)
    def _():
        o_ref[...] = jnp.zeros_like(o_ref)

    o_ref[...] += jnp.dot(
        a_ref[...], b_ref[...], preferred_element_type=jnp.float32
    )


def _bmm_kernel_ksplit_acc(a_ref, b_ref, o_ref, acc_ref):
    # Low-precision (e.g. bf16) output: keep an f32 accumulator scratch and
    # cast once on the final k step.
    k = pl.program_id(3)

    @pl.when(k == 0)
    def _():
        acc_ref[...] = jnp.zeros_like(acc_ref)

    acc_ref[...] += jnp.dot(
        a_ref[...], b_ref[...], preferred_element_type=jnp.float32
    )

    @pl.when(k == pl.num_programs(3) - 1)
    def _():
        o_ref[...] = acc_ref[...].astype(o_ref.dtype)


# --------------------------------------------------------------------------
# Wrapper
# --------------------------------------------------------------------------
def _round_up(x, m):
    return ((x + m - 1) // m) * m


def bmm(a, b, *, tm=256, tn=256, tk=None):
    """C[i] = A[i] @ B[i]  (same semantics as torch.bmm)."""
    B, M, K = a.shape
    B2, K2, N = b.shape
    assert B == B2 and K == K2, "shape mismatch for bmm"
    assert a.dtype == b.dtype, "dtype mismatch for bmm"
    out_dtype = a.dtype
    itemsize = jnp.dtype(out_dtype).itemsize

    # --- tile selection ---------------------------------------------------
    # tm is only a sublane dim (needs %8); tn and tk each sit on the lane axis
    # of at least one operand (need %128).  Prefer 256-aligned tiles for the MXU.
    tm = _round_up(min(tm, _round_up(M, 8)), 8)
    tn = _round_up(min(tn, _round_up(N, 128)), 128)
    k_full = _round_up(K, 128)
    if tk is None:
        # Small/medium K: take the whole reduction in one burst (no k grid
        # axis). Large K: deep 512-wide reduction tiles.
        tk = k_full if k_full <= 2048 else 512
    tk = _round_up(min(tk, k_full), 128)

    # --- pad to tile multiples (zero K-padding is accumulation-safe) -------
    Mp, Np, Kp = _round_up(M, tm), _round_up(N, tn), _round_up(K, tk)
    if (Mp, Kp) != (M, K):
        a = jnp.pad(a, ((0, 0), (0, Mp - M), (0, Kp - K)))
    if (Kp, Np) != (K, N):
        b = jnp.pad(b, ((0, 0), (0, Kp - K), (0, Np - N)))

    nk = Kp // tk
    cost = pl.CostEstimate(
        flops=2 * B * M * N * K,
        bytes_accessed=itemsize * (B * M * K + B * K * N + B * M * N),
        transcendentals=0,
    )

    if nk == 1:
        # No reduction grid axis: one MXU burst per (batch, m, n) tile.
        grid = (B, Mp // tm, Np // tn)
        grid_spec = pltpu.PrefetchScalarGridSpec(
            num_scalar_prefetch=0,
            grid=grid,
            in_specs=[
                pl.BlockSpec((pl.Squeezed(), tm, tk), lambda bi, i, j: (bi, i, 0)),
                pl.BlockSpec((pl.Squeezed(), tk, tn), lambda bi, i, j: (bi, 0, j)),
            ],
            out_specs=pl.BlockSpec(
                (pl.Squeezed(), tm, tn), lambda bi, i, j: (bi, i, j)
            ),
        )
        kernel = _bmm_kernel_single
        dims = ("parallel", "parallel", "parallel")
    else:
        grid = (B, Mp // tm, Np // tn, nk)
        in_specs = [
            pl.BlockSpec((pl.Squeezed(), tm, tk), lambda bi, i, j, k: (bi, i, k)),
            pl.BlockSpec((pl.Squeezed(), tk, tn), lambda bi, i, j, k: (bi, k, j)),
        ]
        out_spec = pl.BlockSpec(
            (pl.Squeezed(), tm, tn), lambda bi, i, j, k: (bi, i, j)
        )
        if out_dtype == jnp.float32:
            kernel = _bmm_kernel_ksplit_f32
            scratch = []
        else:
            kernel = _bmm_kernel_ksplit_acc
            scratch = [pltpu.VMEM((tm, tn), jnp.float32)]
        grid_spec = pltpu.PrefetchScalarGridSpec(
            num_scalar_prefetch=0,
            grid=grid,
            in_specs=in_specs,
            out_specs=out_spec,
            scratch_shapes=scratch,
        )
        dims = ("parallel", "parallel", "parallel", "arbitrary")

    out = pl.pallas_call(
        kernel,
        out_shape=jax.ShapeDtypeStruct((B, Mp, Np), out_dtype),
        grid_spec=grid_spec,
        compiler_params=pltpu.CompilerParams(
            dimension_semantics=dims,
            vmem_limit_bytes=48 * 1024 * 1024,
        ),
        cost_estimate=cost,
    )(a, b)

    if (Mp, Np) != (M, N):
        out = out[:, :M, :N]
    return out


# --------------------------------------------------------------------------
# Demo / correctness check
# --------------------------------------------------------------------------
if __name__ == "__main__":
    key = jax.random.PRNGKey(0)
    ka, kb, kc, kd = jax.random.split(key, 4)

    # 1) Small-K path: whole reduction in one tile, 3-D grid, no accumulator.
    batch, m, k, n = 2, 256, 256, 256
    A = jax.random.normal(ka, (batch, m, k), dtype=jnp.float32)
    B = jax.random.normal(kb, (batch, k, n), dtype=jnp.float32)
    C = jax.block_until_ready(bmm(A, B))
    ref = jnp.einsum("bmk,bkn->bmn", A, B)
    assert C.shape == (batch, m, n)
    assert jnp.allclose(C, ref, atol=1e-3, rtol=1e-3)

    # 2) Forced K-split path (f32 accumulates directly in the resident out tile).
    batch, m, k, n = 2, 128, 384, 128
    A = jax.random.normal(kc, (batch, m, k), dtype=jnp.float32)
    B = jax.random.normal(kd, (batch, k, n), dtype=jnp.float32)
    C = jax.block_until_ready(bmm(A, B, tk=128))
    ref = jnp.einsum("bmk,bkn->bmn", A, B)
    assert C.shape == (batch, m, n)
    assert jnp.allclose(C, ref, atol=1e-3, rtol=1e-3)

    # 3) Non-divisible shapes (padding path).
    batch, m, k, n = 2, 100, 200, 96
    A = jax.random.normal(ka, (batch, m, k), dtype=jnp.float32)
    B = jax.random.normal(kb, (batch, k, n), dtype=jnp.float32)
    C = jax.block_until_ready(bmm(A, B))
    ref = jnp.einsum("bmk,bkn->bmn", A, B)
    assert C.shape == (batch, m, n)
    assert jnp.allclose(C, ref, atol=1e-3, rtol=1e-3)

    # 4) bf16 inputs + forced K-split (exercises the accumulator-scratch path).
    Ab = A.astype(jnp.bfloat16)
    Bb = B.astype(jnp.bfloat16)
    Cb = jax.block_until_ready(bmm(Ab, Bb, tk=128))
    refb = jnp.einsum(
        "bmk,bkn->bmn", Ab.astype(jnp.float32), Bb.astype(jnp.float32)
    )
    assert Cb.dtype == jnp.bfloat16
    assert jnp.allclose(Cb.astype(jnp.float32), refb, atol=0.5, rtol=5e-2)

    print("KERNEL_OK")
</pallas_src>

<mosaic_0001>
module attributes {stable_mosaic.version = 11 : i64} {
  func.func @_bmm_kernel_single(%arg0: i32, %arg1: i32, %arg2: i32, %arg3: memref<1x256x256xf32, #tpu.memory_space<vmem>>, %arg4: memref<1x256x256xf32, #tpu.memory_space<vmem>>, %arg5: memref<1x256x256xf32, #tpu.memory_space<vmem>>) attributes {dimension_semantics = [#tpu.dimension_semantics<parallel>, #tpu.dimension_semantics<parallel>, #tpu.dimension_semantics<parallel>], iteration_bounds = array<i64: 2, 1, 1>, scalar_prefetch = 0 : i64, scratch_operands = 0 : i64, tpu.core_type = #tpu.core_type<tc>, window_params = [{transform_indices = @transform_0, window_bounds = array<i64: 1, 256, 256>}, {transform_indices = @transform_1, window_bounds = array<i64: 1, 256, 256>}, {transform_indices = @transform_2, window_bounds = array<i64: 1, 256, 256>}]} {
    %c0 = arith.constant 0 : index
    %c0_0 = arith.constant 0 : index
    %c0_1 = arith.constant 0 : index
    %0 = vector.load %arg3[%c0, %c0_0, %c0_1] : memref<1x256x256xf32, #tpu.memory_space<vmem>>, vector<1x256x256xf32>
    %1 = vector.shape_cast %0 : vector<1x256x256xf32> to vector<256x256xf32>
    %c0_2 = arith.constant 0 : index
    %c0_3 = arith.constant 0 : index
    %c0_4 = arith.constant 0 : index
    %2 = vector.load %arg4[%c0_2, %c0_3, %c0_4] : memref<1x256x256xf32, #tpu.memory_space<vmem>>, vector<1x256x256xf32>
    %3 = vector.shape_cast %2 : vector<1x256x256xf32> to vector<256x256xf32>
    %cst = arith.constant dense<0.000000e+00> : vector<256x256xf32>
    %4 = tpu.matmul %1, %3, %cst {dimension_numbers = #tpu.dot_dimension_numbers<[1], [0], [0], [1], [0, 0, 1, 1], [], []>} : vector<256x256xf32>, vector<256x256xf32>, vector<256x256xf32> -> vector<256x256xf32>
    %c0_5 = arith.constant 0 : index
    %c0_6 = arith.constant 0 : index
    %c0_7 = arith.constant 0 : index
    %5 = vector.load %arg5[%c0_5, %c0_6, %c0_7] : memref<1x256x256xf32, #tpu.memory_space<vmem>>, vector<1x256x256xf32>
    %6 = vector.shape_cast %5 : vector<1x256x256xf32> to vector<256x256xf32>
    %7 = vector.shape_cast %4 : vector<256x256xf32> to vector<1x256x256xf32>
    tpu.vector_store %arg5[%c0_5, %c0_6, %c0_7], %7 {strides = array<i32>} : memref<1x256x256xf32, #tpu.memory_space<vmem>>, vector<1x256x256xf32>,
    return
  }
  func.func @transform_0(%arg0: i32, %arg1: i32, %arg2: i32) -> (i32, i32, i32) {
    %c0_i32 = arith.constant 0 : i32
    %c0_i32_0 = arith.constant 0 : i32
    return %arg0, %arg1, %c0_i32 : i32, i32, i32
  }
  func.func @transform_1(%arg0: i32, %arg1: i32, %arg2: i32) -> (i32, i32, i32) {
    %c0_i32 = arith.constant 0 : i32
    %c0_i32_0 = arith.constant 0 : i32
    return %arg0, %c0_i32, %arg2 : i32, i32, i32
  }
  func.func @transform_2(%arg0: i32, %arg1: i32, %arg2: i32) -> (i32, i32, i32) {
    %c0_i32 = arith.constant 0 : i32
    return %arg0, %arg1, %arg2 : i32, i32, i32
  }
}

</mosaic_0001>

<llo_original>
// kernel: tpu_custom_call.1
$region0: #{tpu_custom_call.1}
  #allocation0 [shape = 'u32[]', space=smem, size = 0x4, offset = 0x4, fixed_abs, tag = 'smem constant byte address 0x4 - core index']
  #allocation1 [shape = 'u32[144,128]{1,0:T(1,128)}', space=vmem, size = 0x12000, scoped, tag = 'internal scratch']
  %s0 = inlined_call_operand.hbm [shape: f32[2,256,256], index: 0, kind: input, shape index: {}]
  %s1 = inlined_call_operand.hbm [shape: f32[2,256,256], index: 1, kind: input, shape index: {}]
  %s2 = inlined_call_operand.hbm [shape: f32[2,256,256], index: 2, kind: output, shape index: {}]
  %s3 = sld [smem:[#allocation0]]
  $region49: #{tpu_custom_call.1} parent=0
    _
  %s5 = ssub.s32 1, %s3
  %s6 = scalar_select 0, %s5, %s3
  $region1: #{tpu_custom_call.1} parent=0
    #allocation2 [shape = 'u8[524288]{0}', space=vmem, size = 0x80000, scoped, tag = 'input window, operand 0']
    #allocation3 [shape = 's32[2]{0}', space=sflag, size = 0x8, scoped, tag = 'scoped memory for tpu_custom_call.1']
    #allocation4 [shape = 's32[2]{0}', space=sflag, size = 0x8, scoped, tag = 'scoped memory for tpu_custom_call.1']
    #allocation5 [shape = 'u8[524288]{0}', space=vmem, size = 0x80000, scoped, tag = 'input window, operand 1']
    #allocation6 [shape = 's32[2]{0}', space=sflag, size = 0x8, scoped, tag = 'scoped memory for tpu_custom_call.1']
    #allocation7 [shape = 'u8[524288]{0}', space=vmem, size = 0x80000, scoped, tag = 'output window, operand 0']
    %7 = vsyncpa [#allocation3], 0
    %s8 = scalar_lea.sflag [#allocation3], 1
    %9 = vsyncpa %s8, 0
    %10 = vsyncpa [#allocation6], 0
    %s11 = scalar_lea.sflag [#allocation6], 1
    %12 = vsyncpa %s11, 0
    %13 = vsyncpa [#allocation4], 0
    %s14 = scalar_lea.sflag [#allocation4], 1
    %15 = vsyncpa %s14, 0
    loop: start=0, step=1, limit=4
    $region2: #{tpu_custom_call.1} parent=1 // loop_pre_header
      _
    $region3: #{tpu_custom_call.1} parent=1 // loop_header
      %s17 = sphi 0, %s21
      %p18 = scmp.ge.s32.totalorder %s17, 4
      %s24 = sphi 0, %s43
      %s25 = sphi 0, %s39
      %s26 = sphi 0, %s35
      %s27 = sphi 0, %s24
      %s28 = sphi 0, %s25
      %s29 = sphi 0, %s26
      %s30 = sphi 0, %s27
      %s31 = sphi 0, %s28
      %s32 = sphi 0, %s29
      %s48 = sphi 0, %s50
      %s51 = sphi 0, %s48
      %s52 = sphi 0, %s51
      %s68 = sphi 0, %s52
      %s76 = sphi 0, %s78
      %s79 = sphi 0, %s76
      %s80 = sphi 0, %s79
      %s96 = sphi 0, %s80
      %s106 = sphi 0, %s108
      %s109 = sphi 0, %s106
      %s110 = sphi 0, %s109
      %s126 = sphi 0, %s110
    $region4: #{tpu_custom_call.1} parent=1 // loop_header_branch
      %20 = sbr.rel (%p18) target = $region8
    $region5: #{tpu_custom_call.1} parent=1 // loop_body
      %s22 = ssub.s32 %s17, 1
      %s23 = ssub.s32 %s17, 2
      %s33 = sadd.s32 1, %s26
      %p34 = scmp.ge.s32.totalorder %s33, 1
      %s35 = scalar_select %p34, 0, %s33
      %s36 = sadd.s32 1, %s25
      %s37 = scalar_select %p34, %s36, %s25
      %p38 = scmp.ge.s32.totalorder %s37, 1
      %s39 = scalar_select %p38, 0, %s37
      %s40 = sadd.s32 1, %s24
      %s41 = scalar_select %p38, %s40, %s24
      %p42 = scmp.ge.s32.totalorder %s41, 2
      %s43 = scalar_select %p42, 0, %s41
      %s44 = ssub.s32 %s24, %s43
      %s45 = ssub.s32 %s25, %s39
      %s46 = sor.u32 %s44, %s45
      %p47 = scmp.eq.s32.totalorder %s46, 0
      %s49 = sadd.s32 %s48, 1
      %s50 = scalar_select %p47, %s48, %s49
      %p53 = pneg %p47
      %p54 = scmp.eq.s32.totalorder %s17, 1
      %p55 = por %p53, %p54
      %p56 = scmp.ne.s32.totalorder %s48, %s51
      %p57 = scmp.eq.s32.totalorder %s17, 0
      %p58 = por %p56, %p57
      %p59 = scmp.ne.s32.totalorder %s48, %s51
      %p60 = scmp.eq.s32.totalorder %s22, 1
      %p61 = por %p59, %p60
      %p62 = scmp.ne.s32.totalorder %s51, %s52
      %p63 = scmp.eq.s32.totalorder %s22, 0
      %p64 = por %p62, %p63
      %p65 = scmp.ne.s32.totalorder %s51, %s52
      %p66 = scmp.eq.s32.totalorder %s23, 1
      %p67 = por %p65, %p66
      %p69 = scmp.ne.s32.totalorder %s52, %s68
      %p70 = scmp.eq.s32.totalorder %s23, 0
      %p71 = por %p69, %p70
      %s72 = ssub.s32 %s24, %s43
      %s73 = ssub.s32 %s26, %s35
      %s74 = sor.u32 %s72, %s73
      %p75 = scmp.eq.s32.totalorder %s74, 0
      %s77 = sadd.s32 %s76, 1
      %s78 = scalar_select %p75, %s76, %s77
      %p81 = pneg %p75
      %p82 = scmp.eq.s32.totalorder %s17, 1
      %p83 = por %p81, %p82
      %p84 = scmp.ne.s32.totalorder %s76, %s79
      %p85 = scmp.eq.s32.totalorder %s17, 0
      %p86 = por %p84, %p85
      %p87 = scmp.ne.s32.totalorder %s76, %s79
      %p88 = scmp.eq.s32.totalorder %s22, 1
      %p89 = por %p87, %p88
      %p90 = scmp.ne.s32.totalorder %s79, %s80
      %p91 = scmp.eq.s32.totalorder %s22, 0
      %p92 = por %p90, %p91
      %p93 = scmp.ne.s32.totalorder %s79, %s80
      %p94 = scmp.eq.s32.totalorder %s23, 1
      %p95 = por %p93, %p94
      %p97 = scmp.ne.s32.totalorder %s80, %s96
      %p98 = scmp.eq.s32.totalorder %s23, 0
      %p99 = por %p97, %p98
      %s100 = ssub.s32 %s24, %s43
      %s101 = ssub.s32 %s25, %s39
      %s102 = sor.u32 %s100, %s101
      %s103 = ssub.s32 %s26, %s35
      %s104 = sor.u32 %s102, %s103
      %p105 = scmp.eq.s32.totalorder %s104, 0
      %s107 = sadd.s32 %s106, 1
      %s108 = scalar_select %p105, %s106, %s107
      %p111 = pneg %p105
      %p112 = scmp.eq.s32.totalorder %s17, 1
      %p113 = por %p111, %p112
      %p114 = scmp.ne.s32.totalorder %s106, %s109
      %p115 = scmp.eq.s32.totalorder %s17, 0
      %p116 = por %p114, %p115
      %p117 = scmp.ne.s32.totalorder %s106, %s109
      %p118 = scmp.eq.s32.totalorder %s22, 1
      %p119 = por %p117, %p118
      %p120 = scmp.ne.s32.totalorder %s109, %s110
      %p121 = scmp.eq.s32.totalorder %s22, 0
      %p122 = por %p120, %p121
      %p123 = scmp.ne.s32.totalorder %s109, %s110
      %p124 = scmp.eq.s32.totalorder %s23, 1
      %p125 = por %p123, %p124
      %p127 = scmp.ne.s32.totalorder %s110, %s126
      %p128 = scmp.eq.s32.totalorder %s23, 0
      %p129 = por %p127, %p128
      %p130 = scmp.le.s32.totalorder 1, %s17
      %p131 = scmp.lt.s32.totalorder %s17, 3
      %p132 = pnand %p130, %p131
      %p133 = pneg %p132
      // Predicated region
      $region9: #{tpu_custom_call.1} parent=5 // pred_check
        _
      $region10: #{tpu_custom_call.1} parent=5 // pred_check_branch
        %135 = sbr.rel (%p132) target = $region12
      $region11: #{tpu_custom_call.1} parent=5 // pred_region
        %s136 = ssub.s32 %s17, 1
      $region12: #{tpu_custom_call.1} parent=5 // pred_fallthru
        _
      %p137 = scmp.lt.s32.totalorder %s17, 2
      // Predicated region
      $region13: #{tpu_custom_call.1} parent=5 // pred_check
        %p138 = pneg %p137
      $region14: #{tpu_custom_call.1} parent=5 // pred_check_branch
        %140 = sbr.rel (%p138) target = $region16
      $region15: #{tpu_custom_call.1} parent=5 // pred_region
        // Predicated region
        $region17: #{tpu_custom_call.1} parent=15 // pred_check
          %p141 = pneg %p58
        $region18: #{tpu_custom_call.1} parent=15 // pred_check_branch
          %143 = sbr.rel (%p141) target = $region20
        $region19: #{tpu_custom_call.1} parent=15 // pred_region
          %s144 = sand.u32 %s48, 1
          %s145 = scalar_lea.sflag [#allocation3], %s144
          %s146 = sand.u32 %s48, 1
          %s147 = smul.addr %s146, 512
          %s148 = scalar_lea.vmem [#allocation2], %s147
          %s149 = smul.u32 32, %s25
          %s151 = ssub.s32 8192, 8192
          %152 = vsyncadd %s145, %s151
          %s153 = smul.addr %s149, 2
          %s154 = smul.addr %s24, 64
          %s155 = sadd.s32 %s153, %s154
          %s156 = smul.addr %s155, 128
          %s157 = scalar_lea.hbm %s0, %s156
          %s158 = sshll.u32 %s148, 4
          %s159 = int_to_ptr.vmem [resolvable:$true] %s158
          %164 = dma.hbm_to_vmem [thread:$0]  %s157, 8192, %s159, %s145, 256, 256, 16
        $region20: #{tpu_custom_call.1} parent=15 // pred_fallthru
          _
        // Predicated region
        $region21: #{tpu_custom_call.1} parent=15 // pred_check
          %p165 = pneg %p86
        $region22: #{tpu_custom_call.1} parent=15 // pred_check_branch
          %167 = sbr.rel (%p165) target = $region24
        $region23: #{tpu_custom_call.1} parent=15 // pred_region
          %s168 = sand.u32 %s76, 1
          %s169 = scalar_lea.sflag [#allocation6], %s168
          %s170 = sand.u32 %s76, 1
          %s171 = smul.addr %s170, 512
          %s172 = scalar_lea.vmem [#allocation5], %s171
          %s173 = smul.u32 2, %s26
          %s175 = ssub.s32 8192, 8192
          %176 = vsyncadd %s169, %s175
          %s177 = smul.addr %s24, 64
          %s178 = sadd.s32 %s173, %s177
          %s179 = smul.addr %s178, 128
          %s180 = scalar_lea.hbm %s1, %s179
          %s181 = sshll.u32 %s172, 4
          %s182 = int_to_ptr.vmem [resolvable:$true] %s181
          %187 = dma.hbm_to_vmem [thread:$0]  %s180, 8192, %s182, %s169, 256, 256, 16
        $region24: #{tpu_custom_call.1} parent=15 // pred_fallthru
          _
      $region16: #{tpu_custom_call.1} parent=5 // pred_fallthru
        _
      %p188 = scmp.le.s32.totalorder 1, %s17
      %p189 = scmp.lt.s32.totalorder %s17, 3
      %p190 = pnand %p188, %p189
      %p191 = pneg %p190
      // Predicated region
      $region25: #{tpu_custom_call.1} parent=5 // pred_check
        _
      $region26: #{tpu_custom_call.1} parent=5 // pred_check_branch
        %193 = sbr.rel (%p190) target = $region28
      $region27: #{tpu_custom_call.1} parent=5 // pred_region
        %s194 = ssub.s32 %s17, 1
        %s195 = sand.u32 %s51, 1
        %s196 = scalar_lea.sflag [#allocation3], %s195
        %s197 = sand.u32 %s51, 1
        %s198 = smul.addr %s197, 512
        %s199 = scalar_lea.vmem [#allocation2], %s198
        // Predicated region
        $region29: #{tpu_custom_call.1} parent=27 // pred_check
          %p200 = pneg %p64
        $region30: #{tpu_custom_call.1} parent=27 // pred_check_branch
          %202 = sbr.rel (%p200) target = $region32
        $region31: #{tpu_custom_call.1} parent=27 // pred_region
          %203 = dma.done %s196, 8192
        $region32: #{tpu_custom_call.1} parent=27 // pred_fallthru
          _
        %s204 = sand.u32 %s79, 1
        %s205 = scalar_lea.sflag [#allocation6], %s204
        %s206 = sand.u32 %s79, 1
        %s207 = smul.addr %s206, 512
        %s208 = scalar_lea.vmem [#allocation5], %s207
        // Predicated region
        $region33: #{tpu_custom_call.1} parent=27 // pred_check
          %p209 = pneg %p92
        $region34: #{tpu_custom_call.1} parent=27 // pred_check_branch
          %211 = sbr.rel (%p209) target = $region36
        $region35: #{tpu_custom_call.1} parent=27 // pred_region
          %212 = dma.done %s205, 8192
        $region36: #{tpu_custom_call.1} parent=27 // pred_fallthru
          _
        %s213 = sand.u32 %s51, 1
        %s214 = scalar_lea.sflag [#allocation3], %s213
        %s215 = sand.u32 %s51, 1
        %s216 = smul.addr %s215, 512
        %s217 = scalar_lea.vmem [#allocation2], %s216
        %p218 = pneg %p64
        %p219 = pneg %p61
        %s220 = sand.u32 %s79, 1
        %s221 = scalar_lea.sflag [#allocation6], %s220
        %s222 = sand.u32 %s79, 1
        %s223 = smul.addr %s222, 512
        %s224 = scalar_lea.vmem [#allocation5], %s223
        %p225 = pneg %p92
        %p226 = pneg %p89
        %p227 = pneg %p122
        %p228 = pneg %p119
        %s229 = sand.u32 %s109, 1
        %s230 = scalar_lea.sflag [#allocation4], %s229
        %s231 = sand.u32 %s109, 1
        %s232 = smul.addr %s231, 512
        %s233 = scalar_lea.vmem [#allocation7], %s232
        %s234 = smul.u32 32, %s28
        %s235 = smul.u32 2, %s29
        %s236 = smul.u32 32, %s28
        %s237 = smul.u32 2, %s29
        %v238 = vld [vmem:[%s199] sm:$0xff]
        %v239 = vld [vmem:[%s199 + $0x8] sm:$0xff]
        %v240 = vld [vmem:[%s199 + $0x10] sm:$0xff]
        %v241 = vld [vmem:[%s199 + $0x18] sm:$0xff]
        %v242 = vld [vmem:[%s199 + $0x20] sm:$0xff]
        %v243 = vld [vmem:[%s199 + $0x28] sm:$0xff]
        %v244 = vld [vmem:[%s199 + $0x30] sm:$0xff]
        %v245 = vld [vmem:[%s199 + $0x38] sm:$0xff]
        %v246 = vld [vmem:[%s199 + $0x40] sm:$0xff]
        %v247 = vld [vmem:[%s199 + $0x48] sm:$0xff]
        %v248 = vld [vmem:[%s199 + $0x50] sm:$0xff]
        %v249 = vld [vmem:[%s199 + $0x58] sm:$0xff]
        %v250 = vld [vmem:[%s199 + $0x60] sm:$0xff]
        %v251 = vld [vmem:[%s199 + $0x68] sm:$0xff]
        %v252 = vld [vmem:[%s199 + $0x70] sm:$0xff]
        %v253 = vld [vmem:[%s199 + $0x78] sm:$0xff]
        %v254 = vld [vmem:[%s199 + $0x80] sm:$0xff]
        %v255 = vld [vmem:[%s199 + $0x88] sm:$0xff]
        %v256 = vld [vmem:[%s199 + $0x90] sm:$0xff]
        %v257 = vld [vmem:[%s199 + $0x98] sm:$0xff]
        %v258 = vld [vmem:[%s199 + $0xa0] sm:$0xff]
        %v259 = vld [vmem:[%s199 + $0xa8] sm:$0xff]
        %v260 = vld [vmem:[%s199 + $0xb0] sm:$0xff]
        %v261 = vld [vmem:[%s199 + $0xb8] sm:$0xff]
        %v262 = vld [vmem:[%s199 + $0xc0] sm:$0xff]
        %v263 = vld [vmem:[%s199 + $0xc8] sm:$0xff]
        %v264 = vld [vmem:[%s199 + $0xd0] sm:$0xff]
        %v265 = vld [vmem:[%s199 + $0xd8] sm:$0xff]
        %v266 = vld [vmem:[%s199 + $0xe0] sm:$0xff]
        %v267 = vld [vmem:[%s199 + $0xe8] sm:$0xff]
        %v268 = vld [vmem:[%s199 + $0xf0] sm:$0xff]
        %v269 = vld [vmem:[%s199 + $0xf8] sm:$0xff]
        %v270 = vld [vmem:[%s199 + $0x100] sm:$0xff]
        %v271 = vld [vmem:[%s199 + $0x108] sm:$0xff]
        %v272 = vld [vmem:[%s199 + $0x110] sm:$0xff]
        %v273 = vld [vmem:[%s199 + $0x118] sm:$0xff]
        %v274 = vld [vmem:[%s199 + $0x120] sm:$0xff]
        %v275 = vld [vmem:[%s199 + $0x128] sm:$0xff]
        %v276 = vld [vmem:[%s199 + $0x130] sm:$0xff]
        %v277 = vld [vmem:[%s199 + $0x138] sm:$0xff]
        %v278 = vld [vmem:[%s199 + $0x140] sm:$0xff]
        %v279 = vld [vmem:[%s199 + $0x148] sm:$0xff]
        %v280 = vld [vmem:[%s199 + $0x150] sm:$0xff]
        %v281 = vld [vmem:[%s199 + $0x158] sm:$0xff]
        %v282 = vld [vmem:[%s199 + $0x160] sm:$0xff]
        %v283 = vld [vmem:[%s199 + $0x168] sm:$0xff]
        %v284 = vld [vmem:[%s199 + $0x170] sm:$0xff]
        %v285 = vld [vmem:[%s199 + $0x178] sm:$0xff]
        %v286 = vld [vmem:[%s199 + $0x180] sm:$0xff]
        %v287 = vld [vmem:[%s199 + $0x188] sm:$0xff]
        %v288 = vld [vmem:[%s199 + $0x190] sm:$0xff]
        %v289 = vld [vmem:[%s199 + $0x198] sm:$0xff]
        %v290 = vld [vmem:[%s199 + $0x1a0] sm:$0xff]
        %v291 = vld [vmem:[%s199 + $0x1a8] sm:$0xff]
        %v292 = vld [vmem:[%s199 + $0x1b0] sm:$0xff]
        %v293 = vld [vmem:[%s199 + $0x1b8] sm:$0xff]
        %v294 = vld [vmem:[%s199 + $0x1c0] sm:$0xff]
        %v295 = vld [vmem:[%s199 + $0x1c8] sm:$0xff]
        %v296 = vld [vmem:[%s199 + $0x1d0] sm:$0xff]
        %v297 = vld [vmem:[%s199 + $0x1d8] sm:$0xff]
        %v298 = vld [vmem:[%s199 + $0x1e0] sm:$0xff]
        %v299 = vld [vmem:[%s199 + $0x1e8] sm:$0xff]
        %v300 = vld [vmem:[%s199 + $0x1f0] sm:$0xff]
        %v301 = vld [vmem:[%s199 + $0x1f8] sm:$0xff]
        %v302 = vld [vmem:[%s208] sm:$0xff]
        %v303 = vld [vmem:[%s208 + $0x8] sm:$0xff]
        %v304 = vld [vmem:[%s208 + $0x10] sm:$0xff]
        %v305 = vld [vmem:[%s208 + $0x18] sm:$0xff]
        %v306 = vld [vmem:[%s208 + $0x20] sm:$0xff]
        %v307 = vld [vmem:[%s208 + $0x28] sm:$0xff]
        %v308 = vld [vmem:[%s208 + $0x30] sm:$0xff]
        %v309 = vld [vmem:[%s208 + $0x38] sm:$0xff]
        %v310 = vld [vmem:[%s208 + $0x40] sm:$0xff]
        %v311 = vld [vmem:[%s208 + $0x48] sm:$0xff]
        %v312 = vld [vmem:[%s208 + $0x50] sm:$0xff]
        %v313 = vld [vmem:[%s208 + $0x58] sm:$0xff]
        %v314 = vld [vmem:[%s208 + $0x60] sm:$0xff]
        %v315 = vld [vmem:[%s208 + $0x68] sm:$0xff]
        %v316 = vld [vmem:[%s208 + $0x70] sm:$0xff]
        %v317 = vld [vmem:[%s208 + $0x78] sm:$0xff]
        %v318 = vld [vmem:[%s208 + $0x80] sm:$0xff]
        %v319 = vld [vmem:[%s208 + $0x88] sm:$0xff]
        %v320 = vld [vmem:[%s208 + $0x90] sm:$0xff]
        %v321 = vld [vmem:[%s208 + $0x98] sm:$0xff]
        %v322 = vld [vmem:[%s208 + $0xa0] sm:$0xff]
        %v323 = vld [vmem:[%s208 + $0xa8] sm:$0xff]
        %v324 = vld [vmem:[%s208 + $0xb0] sm:$0xff]
        %v325 = vld [vmem:[%s208 + $0xb8] sm:$0xff]
        %v326 = vld [vmem:[%s208 + $0xc0] sm:$0xff]
        %v327 = vld [vmem:[%s208 + $0xc8] sm:$0xff]
        %v328 = vld [vmem:[%s208 + $0xd0] sm:$0xff]
        %v329 = vld [vmem:[%s208 + $0xd8] sm:$0xff]
        %v330 = vld [vmem:[%s208 + $0xe0] sm:$0xff]
        %v331 = vld [vmem:[%s208 + $0xe8] sm:$0xff]
        %v332 = vld [vmem:[%s208 + $0xf0] sm:$0xff]
        %v333 = vld [vmem:[%s208 + $0xf8] sm:$0xff]
        %v334 = vld [vmem:[%s208 + $0x100] sm:$0xff]
        %v335 = vld [vmem:[%s208 + $0x108] sm:$0xff]
        %v336 = vld [vmem:[%s208 + $0x110] sm:$0xff]
        %v337 = vld [vmem:[%s208 + $0x118] sm:$0xff]
        %v338 = vld [vmem:[%s208 + $0x120] sm:$0xff]
        %v339 = vld [vmem:[%s208 + $0x128] sm:$0xff]
        %v340 = vld [vmem:[%s208 + $0x130] sm:$0xff]
        %v341 = vld [vmem:[%s208 + $0x138] sm:$0xff]
        %v342 = vld [vmem:[%s208 + $0x140] sm:$0xff]
        %v343 = vld [vmem:[%s208 + $0x148] sm:$0xff]
        %v344 = vld [vmem:[%s208 + $0x150] sm:$0xff]
        %v345 = vld [vmem:[%s208 + $0x158] sm:$0xff]
        %v346 = vld [vmem:[%s208 + $0x160] sm:$0xff]
        %v347 = vld [vmem:[%s208 + $0x168] sm:$0xff]
        %v348 = vld [vmem:[%s208 + $0x170] sm:$0xff]
        %v349 = vld [vmem:[%s208 + $0x178] sm:$0xff]
        %v350 = vld [vmem:[%s208 + $0x180] sm:$0xff]
        %v351 = vld [vmem:[%s208 + $0x188] sm:$0xff]
        %v352 = vld [vmem:[%s208 + $0x190] sm:$0xff]
        %v353 = vld [vmem:[%s208 + $0x198] sm:$0xff]
        %v354 = vld [vmem:[%s208 + $0x1a0] sm:$0xff]
        %v355 = vld [vmem:[%s208 + $0x1a8] sm:$0xff]
        %v356 = vld [vmem:[%s208 + $0x1b0] sm:$0xff]
        %v357 = vld [vmem:[%s208 + $0x1b8] sm:$0xff]
        %v358 = vld [vmem:[%s208 + $0x1c0] sm:$0xff]
        %v359 = vld [vmem:[%s208 + $0x1c8] sm:$0xff]
        %v360 = vld [vmem:[%s208 + $0x1d0] sm:$0xff]
        %v361 = vld [vmem:[%s208 + $0x1d8] sm:$0xff]
        %v362 = vld [vmem:[%s208 + $0x1e0] sm:$0xff]
        %v363 = vld [vmem:[%s208 + $0x1e8] sm:$0xff]
        %v364 = vld [vmem:[%s208 + $0x1f0] sm:$0xff]
        %v365 = vld [vmem:[%s208 + $0x1f8] sm:$0xff]
        %366 = vmatprep.subr.mxu0 %v303
        %367 = vmatpush1.msra.mxu0 %v302
        %368 = vmatprep.subr.mxu0 %v305
        %369 = vmatpush1.msra.mxu0 %v304
        %370 = vmatprep.subr.mxu0 %v307
        %371 = vmatpush1.msra.mxu0 %v306
        %372 = vmatprep.subr.mxu0 %v309
        %373 = vmatpush1.msra.mxu0 %v308
        %374 = vmatprep.subr.mxu0 %v311
        %375 = vmatpush1.msra.mxu0 %v310
        %376 = vmatprep.subr.mxu0 %v313
        %377 = vmatpush1.msra.mxu0 %v312
        %378 = vmatprep.subr.mxu0 %v315
        %379 = vmatpush1.msra.mxu0 %v314
        %380 = vmatprep.subr.mxu0 %v317
        %381 = vmatpush1.msra.mxu0 %v316
        %382 = vmatprep.subr.mxu0 %v319
        %383 = vmatpush1.msra.mxu0 %v318
        %384 = vmatprep.subr.mxu0 %v321
        %385 = vmatpush1.msra.mxu0 %v320
        %386 = vmatprep.subr.mxu0 %v323
        %387 = vmatpush1.msra.mxu0 %v322
        %388 = vmatprep.subr.mxu0 %v325
        %389 = vmatpush1.msra.mxu0 %v324
        %390 = vmatprep.subr.mxu0 %v327
        %391 = vmatpush1.msra.mxu0 %v326
        %392 = vmatprep.subr.mxu0 %v329
        %393 = vmatpush1.msra.mxu0 %v328
        %394 = vmatprep.subr.mxu0 %v331
        %395 = vmatpush1.msra.mxu0 %v330
        %396 = vmatprep.subr.mxu0 %v333
        %397 = vmatpush1.msra.mxu0 %v332
        %398 = vmatprep.subr.mxu0 %v335
        %399 = vmatpush1.msra.mxu0 %v334
        %400 = vmatprep.subr.mxu0 %v337
        %401 = vmatpush1.msra.mxu0 %v336
        %402 = vmatprep.subr.mxu0 %v339
        %403 = vmatpush1.msra.mxu0 %v338
        %404 = vmatprep.subr.mxu0 %v341
        %405 = vmatpush1.msra.mxu0 %v340
        %406 = vmatprep.subr.mxu0 %v343
        %407 = vmatpush1.msra.mxu0 %v342
        %408 = vmatprep.subr.mxu0 %v345
        %409 = vmatpush1.msra.mxu0 %v344
        %410 = vmatprep.subr.mxu0 %v347
        %411 = vmatpush1.msra.mxu0 %v346
        %412 = vmatprep.subr.mxu0 %v349
        %413 = vmatpush1.msra.mxu0 %v348
        %414 = vmatprep.subr.mxu0 %v351
        %415 = vmatpush1.msra.mxu0 %v350
        %416 = vmatprep.subr.mxu0 %v353
        %417 = vmatpush1.msra.mxu0 %v352
        %418 = vmatprep.subr.mxu0 %v355
        %419 = vmatpush1.msra.mxu0 %v354
        %420 = vmatprep.subr.mxu0 %v357
        %421 = vmatpush1.msra.mxu0 %v356
        %422 = vmatprep.subr.mxu0 %v359
        %423 = vmatpush1.msra.mxu0 %v358
        %424 = vmatprep.subr.mxu0 %v361
        %425 = vmatpush1.msra.mxu0 %v360
        %426 = vmatprep.subr.mxu0 %v363
        %427 = vmatpush1.msra.mxu0 %v362
        %428 = vmatprep.subr.mxu0 %v365
        %429 = vmatpush1.msra.mxu0 %v364
        %430 = vmatprep.mubr.f32.mxu0 %v239
        %431 = vmatmul.mubr.f32.gmra.mrb[0].mxu0 %v238
        %v432 = vpop.f32.mrb[0].mxu0
        %v433 = vadd.f32 0.0, %v432
        %v434 = vpop.f32.mrb[0].mxu0
        %v435 = vadd.f32 0.0, %v434
        %436 = vmatprep.mubr.f32.mxu0 %v241
        %437 = vmatmul.mubr.f32.gmra.mrb[0].mxu0 %v240
        %v438 = vpop.f32.mrb[0].mxu0
        %v439 = vadd.f32 0.0, %v438
        %v440 = vpop.f32.mrb[0].mxu0
        %v441 = vadd.f32 0.0, %v440
        %442 = vmatprep.mubr.f32.mxu0 %v243
        %443 = vmatmul.mubr.f32.gmra.mrb[0].mxu0 %v242
        %v444 = vpop.f32.mrb[0].mxu0
        %v445 = vadd.f32 0.0, %v444
        %v446 = vpop.f32.mrb[0].mxu0
        %v447 = vadd.f32 0.0, %v446
        %448 = vmatprep.mubr.f32.mxu0 %v245
        %449 = vmatmul.mubr.f32.gmra.mrb[0].mxu0 %v244
        %v450 = vpop.f32.mrb[0].mxu0
        %v451 = vadd.f32 0.0, %v450
        %v452 = vpop.f32.mrb[0].mxu0
        %v453 = vadd.f32 0.0, %v452
        %454 = vmatprep.mubr.f32.mxu0 %v247
        %455 = vmatmul.mubr.f32.gmra.mrb[0].mxu0 %v246
        %v456 = vpop.f32.mrb[0].mxu0
        %v457 = vadd.f32 0.0, %v456
        %v458 = vpop.f32.mrb[0].mxu0
        %v459 = vadd.f32 0.0, %v458
        %460 = vmatprep.mubr.f32.mxu0 %v249
        %461 = vmatmul.mubr.f32.gmra.mrb[0].mxu0 %v248
        %v462 = vpop.f32.mrb[0].mxu0
        %v463 = vadd.f32 0.0, %v462
        %v464 = vpop.f32.mrb[0].mxu0
        %v465 = vadd.f32 0.0, %v464
        %466 = vmatprep.mubr.f32.mxu0 %v251
        %467 = vmatmul.mubr.f32.gmra.mrb[0].mxu0 %v250
        %v468 = vpop.f32.mrb[0].mxu0
        %v469 = vadd.f32 0.0, %v468
        %v470 = vpop.f32.mrb[0].mxu0
        %v471 = vadd.f32 0.0, %v470
        %472 = vmatprep.mubr.f32.mxu0 %v253
        %473 = vmatmul.mubr.f32.gmra.mrb[0].mxu0 %v252
        %v474 = vpop.f32.mrb[0].mxu0
        %v475 = vadd.f32 0.0, %v474
        %v476 = vpop.f32.mrb[0].mxu0
        %v477 = vadd.f32 0.0, %v476
        %478 = vmatprep.mubr.f32.mxu0 %v255
        %479 = vmatmul.mubr.f32.gmra.mrb[0].mxu0 %v254
        %v480 = vpop.f32.mrb[0].mxu0
        %v481 = vadd.f32 0.0, %v480
        %v482 = vpop.f32.mrb[0].mxu0
        %v483 = vadd.f32 0.0, %v482
        %484 = vmatprep.mubr.f32.mxu0 %v257
        %485 = vmatmul.mubr.f32.gmra.mrb[0].mxu0 %v256
        %v486 = vpop.f32.mrb[0].mxu0
        %v487 = vadd.f32 0.0, %v486
        %v488 = vpop.f32.mrb[0].mxu0
        %v489 = vadd.f32 0.0, %v488
        %490 = vmatprep.mubr.f32.mxu0 %v259
        %491 = vmatmul.mubr.f32.gmra.mrb[0].mxu0 %v258
        %v492 = vpop.f32.mrb[0].mxu0
        %v493 = vadd.f32 0.0, %v492
        %v494 = vpop.f32.mrb[0].mxu0
        %v495 = vadd.f32 0.0, %v494
        %496 = vmatprep.mubr.f32.mxu0 %v261
        %497 = vmatmul.mubr.f32.gmra.mrb[0].mxu0 %v260
        %v498 = vpop.f32.mrb[0].mxu0
        %v499 = vadd.f32 0.0, %v498
        %v500 = vpop.f32.mrb[0].mxu0
        %v501 = vadd.f32 0.0, %v500
        %502 = vmatprep.mubr.f32.mxu0 %v263
        %503 = vmatmul.mubr.f32.gmra.mrb[0].mxu0 %v262
        %v504 = vpop.f32.mrb[0].mxu0
        %v505 = vadd.f32 0.0, %v504
        %v506 = vpop.f32.mrb[0].mxu0
        %v507 = vadd.f32 0.0, %v506
        %508 = vmatprep.mubr.f32.mxu0 %v265
        %509 = vmatmul.mubr.f32.gmra.mrb[0].mxu0 %v264
        %v510 = vpop.f32.mrb[0].mxu0
        %v511 = vadd.f32 0.0, %v510
        %v512 = vpop.f32.mrb[0].mxu0
        %v513 = vadd.f32 0.0, %v512
        %514 = vmatprep.mubr.f32.mxu0 %v267
        %515 = vmatmul.mubr.f32.gmra.mrb[0].mxu0 %v266
        %v516 = vpop.f32.mrb[0].mxu0
        %v517 = vadd.f32 0.0, %v516
        %v518 = vpop.f32.mrb[0].mxu0
        %v519 = vadd.f32 0.0, %v518
        %520 = vmatprep.mubr.f32.mxu0 %v269
        %521 = vmatmul.mubr.f32.gmra.mrb[0].mxu0 %v268
        %v522 = vpop.f32.mrb[0].mxu0
        %v523 = vadd.f32 0.0, %v522
        %v524 = vpop.f32.mrb[0].mxu0
        %v525 = vadd.f32 0.0, %v524
        %526 = vmatprep.mubr.f32.mxu0 %v271
        %527 = vmatmul.mubr.f32.gmra.mrb[0].mxu0 %v270
        %v528 = vpop.f32.mrb[0].mxu0
        %v529 = vadd.f32 0.0, %v528
        %v530 = vpop.f32.mrb[0].mxu0
        %v531 = vadd.f32 0.0, %v530
        %532 = vmatprep.mubr.f32.mxu0 %v273
        %533 = vmatmul.mubr.f32.gmra.mrb[0].mxu0 %v272
        %v534 = vpop.f32.mrb[0].mxu0
        %v535 = vadd.f32 0.0, %v534
        %v536 = vpop.f32.mrb[0].mxu0
        %v537 = vadd.f32 0.0, %v536
        %538 = vmatprep.mubr.f32.mxu0 %v275
        %539 = vmatmul.mubr.f32.gmra.mrb[0].mxu0 %v274
        %v540 = vpop.f32.mrb[0].mxu0
        %v541 = vadd.f32 0.0, %v540
        %v542 = vpop.f32.mrb[0].mxu0
        %v543 = vadd.f32 0.0, %v542
        %544 = vmatprep.mubr.f32.mxu0 %v277
        %545 = vmatmul.mubr.f32.gmra.mrb[0].mxu0 %v276
        %v546 = vpop.f32.mrb[0].mxu0
        %v547 = vadd.f32 0.0, %v546
        %v548 = vpop.f32.mrb[0].mxu0
        %v549 = vadd.f32 0.0, %v548
        %550 = vmatprep.mubr.f32.mxu0 %v279
        %551 = vmatmul.mubr.f32.gmra.mrb[0].mxu0 %v278
        %v552 = vpop.f32.mrb[0].mxu0
        %v553 = vadd.f32 0.0, %v552
        %v554 = vpop.f32.mrb[0].mxu0
        %v555 = vadd.f32 0.0, %v554
        %556 = vmatprep.mubr.f32.mxu0 %v281
        %557 = vmatmul.mubr.f32.gmra.mrb[0].mxu0 %v280
        %v558 = vpop.f32.mrb[0].mxu0
        %v559 = vadd.f32 0.0, %v558
        %v560 = vpop.f32.mrb[0].mxu0
        %v561 = vadd.f32 0.0, %v560
        %562 = vmatprep.mubr.f32.mxu0 %v283
        %563 = vmatmul.mubr.f32.gmra.mrb[0].mxu0 %v282
        %v564 = vpop.f32.mrb[0].mxu0
        %v565 = vadd.f32 0.0, %v564
        %v566 = vpop.f32.mrb[0].mxu0
        %v567 = vadd.f32 0.0, %v566
        %568 = vmatprep.mubr.f32.mxu0 %v285
        %569 = vmatmul.mubr.f32.gmra.mrb[0].mxu0 %v284
        %v570 = vpop.f32.mrb[0].mxu0
        %v571 = vadd.f32 0.0, %v570
        %v572 = vpop.f32.mrb[0].mxu0
        %v573 = vadd.f32 0.0, %v572
        %574 = vmatprep.mubr.f32.mxu0 %v287
        %575 = vmatmul.mubr.f32.gmra.mrb[0].mxu0 %v286
        %v576 = vpop.f32.mrb[0].mxu0
        %v577 = vadd.f32 0.0, %v576
        %v578 = vpop.f32.mrb[0].mxu0
        %v579 = vadd.f32 0.0, %v578
        %580 = vmatprep.mubr.f32.mxu0 %v289
        %581 = vmatmul.mubr.f32.gmra.mrb[0].mxu0 %v288
        %v582 = vpop.f32.mrb[0].mxu0
        %v583 = vadd.f32 0.0, %v582
        %v584 = vpop.f32.mrb[0].mxu0
        %v585 = vadd.f32 0.0, %v584
        %586 = vmatprep.mubr.f32.mxu0 %v291
        %587 = vmatmul.mubr.f32.gmra.mrb[0].mxu0 %v290
        %v588 = vpop.f32.mrb[0].mxu0
        %v589 = vadd.f32 0.0, %v588
        %v590 = vpop.f32.mrb[0].mxu0
        %v591 = vadd.f32 0.0, %v590
        %592 = vmatprep.mubr.f32.mxu0 %v293
        %593 = vmatmul.mubr.f32.gmra.mrb[0].mxu0 %v292
        %v594 = vpop.f32.mrb[0].mxu0
        %v595 = vadd.f32 0.0, %v594
        %v596 = vpop.f32.mrb[0].mxu0
        %v597 = vadd.f32 0.0, %v596
        %598 = vmatprep.mubr.f32.mxu0 %v295
        %599 = vmatmul.mubr.f32.gmra.mrb[0].mxu0 %v294
        %v600 = vpop.f32.mrb[0].mxu0
        %v601 = vadd.f32 0.0, %v600
        %v602 = vpop.f32.mrb[0].mxu0
        %v603 = vadd.f32 0.0, %v602
        %604 = vmatprep.mubr.f32.mxu0 %v297
        %605 = vmatmul.mubr.f32.gmra.mrb[0].mxu0 %v296
        %v606 = vpop.f32.mrb[0].mxu0
        %v607 = vadd.f32 0.0, %v606
        %v608 = vpop.f32.mrb[0].mxu0
        %v609 = vadd.f32 0.0, %v608
        %610 = vmatprep.mubr.f32.mxu0 %v299
        %611 = vmatmul.mubr.f32.gmra.mrb[0].mxu0 %v298
        %v612 = vpop.f32.mrb[0].mxu0
        %v613 = vadd.f32 0.0, %v612
        %v614 = vpop.f32.mrb[0].mxu0
        %v615 = vadd.f32 0.0, %v614
        %616 = vmatprep.mubr.f32.mxu0 %v301
        %617 = vmatmul.mubr.f32.gmra.mrb[0].mxu0 %v300
        %v618 = vpop.f32.mrb[0].mxu0
        %v619 = vadd.f32 0.0, %v618
        %v620 = vpop.f32.mrb[0].mxu0
        %v621 = vadd.f32 0.0, %v620
        %622 = vdwg.mxu0
        %623 = vst [vmem:[%s233] sm:$0xff] %v433
        %624 = vst [vmem:[%s233 + $0x8] sm:$0xff] %v435
        %625 = vst [vmem:[%s233 + $0x10] sm:$0xff] %v439
        %626 = vst [vmem:[%s233 + $0x18] sm:$0xff] %v441
        %627 = vst [vmem:[%s233 + $0x20] sm:$0xff] %v445
        %628 = vst [vmem:[%s233 + $0x28] sm:$0xff] %v447
        %629 = vst [vmem:[%s233 + $0x30] sm:$0xff] %v451
        %630 = vst [vmem:[%s233 + $0x38] sm:$0xff] %v453
        %631 = vst [vmem:[%s233 + $0x40] sm:$0xff] %v457
        %632 = vst [vmem:[%s233 + $0x48] sm:$0xff] %v459
        %633 = vst [vmem:[%s233 + $0x50] sm:$0xff] %v463
        %634 = vst [vmem:[%s233 + $0x58] sm:$0xff] %v465
        %635 = vst [vmem:[%s233 + $0x60] sm:$0xff] %v469
        %636 = vst [vmem:[%s233 + $0x68] sm:$0xff] %v471
        %637 = vst [vmem:[%s233 + $0x70] sm:$0xff] %v475
        %638 = vst [vmem:[%s233 + $0x78] sm:$0xff] %v477
        %639 = vst [vmem:[%s233 + $0x80] sm:$0xff] %v481
        %640 = vst [vmem:[%s233 + $0x88] sm:$0xff] %v483
        %641 = vst [vmem:[%s233 + $0x90] sm:$0xff] %v487
        %642 = vst [vmem:[%s233 + $0x98] sm:$0xff] %v489
        %643 = vst [vmem:[%s233 + $0xa0] sm:$0xff] %v493
        %644 = vst [vmem:[%s233 + $0xa8] sm:$0xff] %v495
        %645 = vst [vmem:[%s233 + $0xb0] sm:$0xff] %v499
        %646 = vst [vmem:[%s233 + $0xb8] sm:$0xff] %v501
        %647 = vst [vmem:[%s233 + $0xc0] sm:$0xff] %v505
        %648 = vst [vmem:[%s233 + $0xc8] sm:$0xff] %v507
        %649 = vst [vmem:[%s233 + $0xd0] sm:$0xff] %v511
        %650 = vst [vmem:[%s233 + $0xd8] sm:$0xff] %v513
        %651 = vst [vmem:[%s233 + $0xe0] sm:$0xff] %v517
        %652 = vst [vmem:[%s233 + $0xe8] sm:$0xff] %v519
        %653 = vst [vmem:[%s233 + $0xf0] sm:$0xff] %v523
        %654 = vst [vmem:[%s233 + $0xf8] sm:$0xff] %v525
        %655 = vst [vmem:[%s233 + $0x100] sm:$0xff] %v529
        %656 = vst [vmem:[%s233 + $0x108] sm:$0xff] %v531
        %657 = vst [vmem:[%s233 + $0x110] sm:$0xff] %v535
        %658 = vst [vmem:[%s233 + $0x118] sm:$0xff] %v537
        %659 = vst [vmem:[%s233 + $0x120] sm:$0xff] %v541
        %660 = vst [vmem:[%s233 + $0x128] sm:$0xff] %v543
        %661 = vst [vmem:[%s233 + $0x130] sm:$0xff] %v547
        %662 = vst [vmem:[%s233 + $0x138] sm:$0xff] %v549
        %663 = vst [vmem:[%s233 + $0x140] sm:$0xff] %v553
        %664 = vst [vmem:[%s233 + $0x148] sm:$0xff] %v555
        %665 = vst [vmem:[%s233 + $0x150] sm:$0xff] %v559
        %666 = vst [vmem:[%s233 + $0x158] sm:$0xff] %v561
        %667 = vst [vmem:[%s233 + $0x160] sm:$0xff] %v565
        %668 = vst [vmem:[%s233 + $0x168] sm:$0xff] %v567
        %669 = vst [vmem:[%s233 + $0x170] sm:$0xff] %v571
        %670 = vst [vmem:[%s233 + $0x178] sm:$0xff] %v573
        %671 = vst [vmem:[%s233 + $0x180] sm:$0xff] %v577
        %672 = vst [vmem:[%s233 + $0x188] sm:$0xff] %v579
        %673 = vst [vmem:[%s233 + $0x190] sm:$0xff] %v583
        %674 = vst [vmem:[%s233 + $0x198] sm:$0xff] %v585
        %675 = vst [vmem:[%s233 + $0x1a0] sm:$0xff] %v589
        %676 = vst [vmem:[%s233 + $0x1a8] sm:$0xff] %v591
        %677 = vst [vmem:[%s233 + $0x1b0] sm:$0xff] %v595
        %678 = vst [vmem:[%s233 + $0x1b8] sm:$0xff] %v597
        %679 = vst [vmem:[%s233 + $0x1c0] sm:$0xff] %v601
        %680 = vst [vmem:[%s233 + $0x1c8] sm:$0xff] %v603
        %681 = vst [vmem:[%s233 + $0x1d0] sm:$0xff] %v607
        %682 = vst [vmem:[%s233 + $0x1d8] sm:$0xff] %v609
        %683 = vst [vmem:[%s233 + $0x1e0] sm:$0xff] %v613
        %684 = vst [vmem:[%s233 + $0x1e8] sm:$0xff] %v615
        %685 = vst [vmem:[%s233 + $0x1f0] sm:$0xff] %v619
        %686 = vst [vmem:[%s233 + $0x1f8] sm:$0xff] %v621
        %s687 = sand.u32 %s109, 1
        %s688 = scalar_lea.sflag [#allocation4], %s687
        %s689 = sand.u32 %s109, 1
        %s690 = smul.addr %s689, 512
        %s691 = scalar_lea.vmem [#allocation7], %s690
        // Predicated region
        $region37: #{tpu_custom_call.1} parent=27 // pred_check
          %p692 = pneg %p119
        $region38: #{tpu_custom_call.1} parent=27 // pred_check_branch
          %694 = sbr.rel (%p692) target = $region40
        $region39: #{tpu_custom_call.1} parent=27 // pred_region
          %s695 = smul.u32 32, %s28
          %s696 = smul.u32 2, %s29
          %s698 = ssub.s32 8192, 8192
          %699 = vsyncadd %s688, %s698
          %s700 = smul.addr %s695, 2
          %s701 = sadd.s32 %s696, %s700
          %s702 = smul.addr %s27, 64
          %s703 = sadd.s32 %s701, %s702
          %s704 = smul.addr %s703, 128
          %s705 = scalar_lea.hbm %s2, %s704
          %s706 = sshll.u32 %s691, 4
          %s707 = int_to_ptr.vmem [resolvable:$true] %s706
          %712 = dma.vmem_to_hbm [thread:$0]  %s707, 8192, %s705, %s688, 256, 256, 16
        $region40: #{tpu_custom_call.1} parent=27 // pred_fallthru
          _
      $region28: #{tpu_custom_call.1} parent=5 // pred_fallthru
        _
      %p713 = scmp.le.s32.totalorder 2, %s17
      // Predicated region
      $region41: #{tpu_custom_call.1} parent=5 // pred_check
        %p714 = pneg %p713
      $region42: #{tpu_custom_call.1} parent=5 // pred_check_branch
        %716 = sbr.rel (%p714) target = $region44
      $region43: #{tpu_custom_call.1} parent=5 // pred_region
        %s717 = ssub.s32 %s17, 2
        // Predicated region
        $region45: #{tpu_custom_call.1} parent=43 // pred_check
          %p718 = pneg %p125
        $region46: #{tpu_custom_call.1} parent=43 // pred_check_branch
          %720 = sbr.rel (%p718) target = $region48
        $region47: #{tpu_custom_call.1} parent=43 // pred_region
          %s721 = sand.u32 %s110, 1
          %s722 = scalar_lea.sflag [#allocation4], %s721
          %s723 = sand.u32 %s110, 1
          %s724 = smul.addr %s723, 512
          %s725 = scalar_lea.vmem [#allocation7], %s724
          %726 = dma.done %s722, 8192
        $region48: #{tpu_custom_call.1} parent=43 // pred_fallthru
          _
      $region44: #{tpu_custom_call.1} parent=5 // pred_fallthru
        _
    $region6: #{tpu_custom_call.1} parent=1 // loop_footer
      %s21 = sadd.s32 1, %s17
    $region7: #{tpu_custom_call.1} parent=1 // loop_footer_branch
      %16 = sbr.rel target = $region3
    $region8: #{tpu_custom_call.1} parent=1 // loop_exit
      _
    %727 = vsyncpa [#allocation3], 1
    %s728 = scalar_lea.sflag [#allocation3], 1
    %729 = vsyncpa %s728, 1
    %730 = vsyncpa [#allocation6], 1
    %s731 = scalar_lea.sflag [#allocation6], 1
    %732 = vsyncpa %s731, 1
    %733 = vsyncpa [#allocation4], 1
    %s734 = scalar_lea.sflag [#allocation4], 1
    %735 = vsyncpa %s734, 1

</llo_original>
